<compile_context>
chip_gen: v5e
topology: v5e:2x2
jax: 0.10.0
libtpu: 0.0.40
codegen_flags: <defaults>
</compile_context>

<pallas_src>
import functools

import jax
import jax.numpy as jnp
from jax.experimental import pallas as pl
from jax.experimental.pallas import tpu as pltpu


def _attention_kernel(x_ref, w_ref, yt_ref, *, c, cp, bt):
    # x_ref:  (bt, c, N) f32      w_ref: (3*cp, c) bf16 (stacked phi/theta/g)
    # yt_ref: (bt, N, c) bf16     (y^T so the host-side relayout is a free reshape)
    w_all = w_ref[...]

    def body(bi, carry):
        xb = x_ref[bi].astype(w_all.dtype)                      # (c, N) bf16 for MXU
        # One projection matmul for all three 1x1 convs (f32 accumulation).
        proj = jnp.dot(w_all, xb, preferred_element_type=jnp.float32)   # (3cp, N)
        phi = proj[0:c]                                          # (c, N) f32
        theta = proj[cp:cp + c]
        g = proj[2 * cp:2 * cp + c]

        # mul_theta_phi = x_phi @ x_theta^T : contract over spatial N -> (c, c)
        attn = jax.lax.dot_general(
            phi, theta,
            dimension_numbers=(((1,), (1,)), ((), ())),
            preferred_element_type=jnp.float32)

        # f32 softmax over the last dim; denominator via EUP approx reciprocal.
        attn = jnp.exp(attn - jnp.max(attn, axis=-1, keepdims=True))
        attn = attn * pl.reciprocal(jnp.sum(attn, axis=-1, keepdims=True),
                                    approx=True)

        # y = attn @ g on the MXU (standard orientation), then one XLU
        # transpose of the (c, N) result so the stored buffer is y^T.
        y = jnp.dot(attn, g, preferred_element_type=jnp.float32)        # (c, N)
        yt_ref[bi] = jnp.transpose(y).astype(yt_ref.dtype)              # (N, c)
        return carry

    if bt == 1:
        body(0, 0)
    else:
        jax.lax.fori_loop(0, bt, body, 0)


def _mask_kernel(r_ref, x_ref, w_ref, gamma_ref, o_ref, *, bt):
    # r_ref: (bt, c, N) bf16   x_ref/o_ref: (bt, c, N) f32
    # w_ref: (c, c) bf16       gamma_ref: (1,) f32 in SMEM
    w_mask = w_ref[...]
    gamma = gamma_ref[0]

    def body(bi, carry):
        mask = jnp.dot(w_mask, r_ref[bi], preferred_element_type=jnp.float32)
        o_ref[bi] = (mask * gamma + x_ref[bi]).astype(o_ref.dtype)
        return carry

    if bt == 1:
        body(0, 0)
    else:
        jax.lax.fori_loop(0, bt, body, 0)


def _pick_bt(b, per_batch_io_bytes, budget_bytes=4 << 20, min_steps=4):
    """Largest divisor of b whose block fits the budget and leaves >= min_steps
    grid steps (so DMA/compute overlap and both v7x TCs stay busy)."""
    best = 1
    for d in range(1, b + 1):
        if b % d:
            continue
        if d * per_batch_io_bytes > budget_bytes:
            continue
        if d != 1 and (b // d) < min_steps:
            continue
        best = max(best, d)
    return best


def cam_forward(x, w_phi, w_theta, w_g, w_mask, gamma,
                matmul_dtype=jnp.bfloat16):
    b, c, h, w = x.shape
    n = h * w
    x_flat = x.reshape(b, c, n).astype(jnp.float32)

    # Stack the three projection weights, padding each to a multiple of 8 rows
    # so the static slices of the fused projection output are sublane-aligned.
    cp = ((c + 7) // 8) * 8

    def _pad_rows(wm):
        return jnp.pad(wm, ((0, cp - c), (0, 0)))

    w_stack = jnp.concatenate(
        [_pad_rows(w_phi), _pad_rows(w_theta), _pad_rows(w_g)],
        axis=0).astype(matmul_dtype)                         # (3*cp, c)
    w_mask_m = w_mask.astype(matmul_dtype)                   # (c, c)
    gamma_arr = jnp.asarray(gamma, jnp.float32).reshape(1)

    # Batches per grid step: amortize the ~0.35us per-step overhead for tiny
    # problems, but keep nb = b/bt >= 4 so the pipeline actually overlaps.
    per_batch_io = c * n * (4 + 4 + 2)       # x f32 read, out f32 write, y bf16
    bt = _pick_bt(b, per_batch_io)
    nb = b // bt

    # Per-generation VMEM budget (v5e/v6e: 128 MiB physical -> ~96 MiB cap;
    # v7x: 64 MiB -> 48 MiB cap).
    try:
        vmem_cap = int(pltpu.get_tpu_info().vmem_capacity_bytes)
    except Exception:                                        # pragma: no cover
        vmem_cap = 64 << 20
    per_step_io = bt * c * n * (4 + 2)                 # x in (f32) + y^T out (bf16)
    body_tmp = (3 * cp + 4 * c) * n * 4                # proj + phi/theta/g + y (one batch)
    weights = (3 * cp + c) * c * 4
    est = 2 * per_step_io + body_tmp + weights         # double-buffered I/O blocks
    vmem_limit = int(min(max(2 * est, 32 << 20), (vmem_cap * 3) // 4))
    cparams = pltpu.CompilerParams(
        dimension_semantics=("parallel",),
        vmem_limit_bytes=vmem_limit)

    # Kernel 1: fused projection, attention, f32 softmax, attn @ g, emit y^T.
    k1 = functools.partial(_attention_kernel, c=c, cp=cp, bt=bt)
    yt = pl.pallas_call(
        k1,
        out_shape=jax.ShapeDtypeStruct((b, n, c), matmul_dtype),
        grid=(nb,),
        in_specs=[pl.BlockSpec((bt, c, n), lambda i: (i, 0, 0)),
                  pl.BlockSpec((3 * cp, c), lambda i: (0, 0))],
        out_specs=pl.BlockSpec((bt, n, c), lambda i: (i, 0, 0)),
        compiler_params=cparams,
    )(x_flat, w_stack)

    # PyTorch: mul_theta_phi_g.permute(0, 2, 1).contiguous().view(b, c, h, w)
    # == reinterpret the row-major (b, N, c) buffer as (b, c, N): a free
    # bitcast reshape, no transpose kernel, no extra HBM round trip.
    r = yt.reshape(b, c, n)

    # Kernel 2: mask = conv_mask(r); out = mask * gamma + x.
    k2 = functools.partial(_mask_kernel, bt=bt)
    out = pl.pallas_call(
        k2,
        out_shape=jax.ShapeDtypeStruct((b, c, n), jnp.float32),
        grid=(nb,),
        in_specs=[pl.BlockSpec((bt, c, n), lambda i: (i, 0, 0)),
                  pl.BlockSpec((bt, c, n), lambda i: (i, 0, 0)),
                  pl.BlockSpec((c, c), lambda i: (0, 0)),
                  pl.BlockSpec(memory_space=pltpu.MemorySpace.SMEM)],
        out_specs=pl.BlockSpec((bt, c, n), lambda i: (i, 0, 0)),
        compiler_params=cparams,
    )(r, x_flat, w_mask_m, gamma_arr)

    return out.reshape(b, c, h, w)


def cam_reference(x, w_phi, w_theta, w_g, w_mask, gamma,
                  matmul_dtype=jnp.float32):
    # Pure-JAX reference mirroring the PyTorch forward.  With
    # matmul_dtype=bfloat16 it mirrors the kernel's mixed-precision matmuls.
    b, c, h, w = x.shape
    n = h * w
    xf = x.reshape(b, c, n).astype(jnp.float32)
    xm = xf.astype(matmul_dtype)

    def proj(wm):
        return jnp.einsum('oc,bcn->bon', wm.astype(matmul_dtype), xm,
                          preferred_element_type=jnp.float32)

    phi, theta, g = proj(w_phi), proj(w_theta), proj(w_g)
    attn = jnp.einsum('bin,bjn->bij', phi, theta,
                      preferred_element_type=jnp.float32)     # x_phi @ x_theta^T
    attn = jax.nn.softmax(attn, axis=-1)
    y = jnp.einsum('bij,bjn->bin', attn, g,
                   preferred_element_type=jnp.float32)
    y = y.astype(matmul_dtype)                  # mirrors the bf16 HBM round trip
    r = jnp.transpose(y, (0, 2, 1)).reshape(b, c, n)
    mask = jnp.einsum('oc,bcn->bon', w_mask.astype(matmul_dtype), r,
                      preferred_element_type=jnp.float32)
    return (mask * jnp.float32(gamma) + xf).reshape(b, c, h, w)


if __name__ == "__main__":
    b, c, h, w = 2, 4, 16, 16

    key = jax.random.PRNGKey(0)
    kx, kphi, ktheta, kg, kmask = jax.random.split(key, 5)

    x = jax.random.normal(kx, (b, c, h, w), jnp.float32)

    # 1x1 conv weights: nn.Conv2d(c, c, 1, bias=False) -> (c, c, 1, 1) squeezed to (c, c).
    w_phi = jax.random.normal(kphi, (c, c), jnp.float32) * 0.1
    w_theta = jax.random.normal(ktheta, (c, c), jnp.float32) * 0.1
    w_g = jax.random.normal(kg, (c, c), jnp.float32) * 0.1
    w_mask = jax.random.normal(kmask, (c, c), jnp.float32) * 0.1

    # PyTorch initializes gamma (nn.Parameter(torch.zeros(1))) to 0; use a
    # nonzero deterministic value so the attention path actually affects output.
    gamma = jnp.float32(0.5)

    cam = jax.jit(cam_forward)
    out = cam(x, w_phi, w_theta, w_g, w_mask, gamma)
    out = jax.block_until_ready(out)
    assert out.shape == (b, c, h, w)

    # Check against a reference mirroring the kernel's bf16 matmul path
    # (tolerance also covers the EUP approximate reciprocal in the softmax).
    ref_mixed = cam_reference(x, w_phi, w_theta, w_g, w_mask, gamma,
                              matmul_dtype=jnp.bfloat16)
    assert jnp.allclose(out, ref_mixed, atol=1e-2, rtol=1e-2), \
        "mismatch vs mixed-precision reference"

    # Loose check against the pure-f32 PyTorch-equivalent reference
    # (bounds the bf16 quantization error of the matmul operands).
    ref_f32 = cam_reference(x, w_phi, w_theta, w_g, w_mask, gamma,
                            matmul_dtype=jnp.float32)
    assert jnp.allclose(out, ref_f32, atol=3e-2, rtol=3e-2), \
        "mismatch vs float32 reference"

    print("KERNEL_OK")
</pallas_src>

<mosaic_0001>
module attributes {stable_mosaic.version = 11 : i64} {
  func.func @_attention_kernel(%arg0: i32, %arg1: memref<1x4x256xf32, #tpu.memory_space<vmem>>, %arg2: memref<24x4xbf16, #tpu.memory_space<vmem>>, %arg3: memref<1x256x4xbf16, #tpu.memory_space<vmem>>) attributes {dimension_semantics = [#tpu.dimension_semantics<parallel>], iteration_bounds = array<i64: 2>, scalar_prefetch = 0 : i64, scratch_operands = 0 : i64, tpu.core_type = #tpu.core_type<tc>, window_params = [{transform_indices = @transform_0, window_bounds = array<i64: 1, 4, 256>}, {pipeline_mode = #tpu.pipeline_mode<synchronous>, transform_indices = @transform_1, window_bounds = array<i64: 24, 4>}, {transform_indices = @transform_2, window_bounds = array<i64: 1, 256, 4>}]} {
    %c0 = arith.constant 0 : index
    %c0_0 = arith.constant 0 : index
    %0 = vector.load %arg2[%c0, %c0_0] : memref<24x4xbf16, #tpu.memory_space<vmem>>, vector<24x4xbf16>
    %c0_1 = arith.constant 0 : index
    %c0_2 = arith.constant 0 : index
    %c0_3 = arith.constant 0 : index
    %1 = vector.load %arg1[%c0_1, %c0_2, %c0_3] : memref<1x4x256xf32, #tpu.memory_space<vmem>>, vector<1x4x256xf32>
    %2 = vector.shape_cast %1 : vector<1x4x256xf32> to vector<4x256xf32>
    %3 = arith.truncf %2 : vector<4x256xf32> to vector<4x256xbf16>
    %cst = arith.constant dense<0.000000e+00> : vector<24x256xf32>
    %4 = tpu.matmul %0, %3, %cst {dimension_numbers = #tpu.dot_dimension_numbers<[1], [0], [0], [1], [0, 0, 1, 1], [], []>} : vector<24x4xbf16>, vector<4x256xbf16>, vector<24x256xf32> -> vector<24x256xf32>
    %5 = vector.extract_strided_slice %4 {offsets = [0, 0], sizes = [4, 256], strides = [1, 1]} : vector<24x256xf32> to vector<4x256xf32>
    %6 = vector.extract_strided_slice %4 {offsets = [8, 0], sizes = [4, 256], strides = [1, 1]} : vector<24x256xf32> to vector<4x256xf32>
    %7 = vector.extract_strided_slice %4 {offsets = [16, 0], sizes = [4, 256], strides = [1, 1]} : vector<24x256xf32> to vector<4x256xf32>
    %cst_4 = arith.constant dense<0.000000e+00> : vector<4x4xf32>
    %8 = tpu.matmul %5, %6, %cst_4 {dimension_numbers = #tpu.dot_dimension_numbers<[1], [1], [0], [0], [0, 0, 1, 0], [], []>} : vector<4x256xf32>, vector<4x256xf32>, vector<4x4xf32> -> vector<4x4xf32>
    %cst_5 = arith.constant dense<0xFF800000> : vector<4xf32>
    %9 = vector.multi_reduction <maximumf>, %8, %cst_5 [1] : vector<4x4xf32> to vector<4xf32>
    %10 = vector.shape_cast %9 : vector<4xf32> to vector<4x1xf32>
    %11 = vector.broadcast %10 : vector<4x1xf32> to vector<4x4xf32>
    %12 = arith.subf %8, %11 : vector<4x4xf32>
    %13 = math.exp %12 : vector<4x4xf32>
    %cst_6 = arith.constant dense<0.000000e+00> : vector<4xf32>
    %14 = vector.multi_reduction <add>, %13, %cst_6 [1] : vector<4x4xf32> to vector<4xf32>
    %15 = vector.shape_cast %14 : vector<4xf32> to vector<4x1xf32>
    %16 = tpu.reciprocal %15 {approx = true} : vector<4x1xf32> -> vector<4x1xf32>
    %17 = vector.broadcast %16 : vector<4x1xf32> to vector<4x4xf32>
    %18 = arith.mulf %13, %17 : vector<4x4xf32>
    %cst_7 = arith.constant dense<0.000000e+00> : vector<4x256xf32>
    %19 = tpu.matmul %18, %7, %cst_7 {dimension_numbers = #tpu.dot_dimension_numbers<[1], [0], [0], [1], [0, 0, 1, 1], [], []>} : vector<4x4xf32>, vector<4x256xf32>, vector<4x256xf32> -> vector<4x256xf32>
    %20 = tpu.transpose %19, [1, 0] : vector<4x256xf32> -> vector<256x4xf32>
    %21 = arith.truncf %20 : vector<256x4xf32> to vector<256x4xbf16>
    %c0_8 = arith.constant 0 : index
    %c0_9 = arith.constant 0 : index
    %c0_10 = arith.constant 0 : index
    %22 = vector.load %arg3[%c0_8, %c0_9, %c0_10] : memref<1x256x4xbf16, #tpu.memory_space<vmem>>, vector<1x256x4xbf16>
    %23 = vector.shape_cast %22 : vector<1x256x4xbf16> to vector<256x4xbf16>
    %24 = vector.shape_cast %21 : vector<256x4xbf16> to vector<1x256x4xbf16>
    tpu.vector_store %arg3[%c0_8, %c0_9, %c0_10], %24 {strides = array<i32>} : memref<1x256x4xbf16, #tpu.memory_space<vmem>>, vector<1x256x4xbf16>,
    return
  }
  func.func @transform_0(%arg0: i32) -> (i32, i32, i32) {
    %c0_i32 = arith.constant 0 : i32
    %c0_i32_0 = arith.constant 0 : i32
    %c0_i32_1 = arith.constant 0 : i32
    return %arg0, %c0_i32, %c0_i32_0 : i32, i32, i32
  }
  func.func @transform_1(%arg0: i32) -> (i32, i32) {
    %c0_i32 = arith.constant 0 : i32
    %c0_i32_0 = arith.constant 0 : i32
    %c0_i32_1 = arith.constant 0 : i32
    return %c0_i32, %c0_i32_0 : i32, i32
  }
  func.func @transform_2(%arg0: i32) -> (i32, i32, i32) {
    %c0_i32 = arith.constant 0 : i32
    %c0_i32_0 = arith.constant 0 : i32
    %c0_i32_1 = arith.constant 0 : i32
    return %arg0, %c0_i32, %c0_i32_0 : i32, i32, i32
  }
}

module attributes {stable_mosaic.version = 11 : i64} {
  func.func @_mask_kernel(%arg0: i32, %arg1: memref<1x4x256xbf16, #tpu.memory_space<vmem>>, %arg2: memref<1x4x256xf32, #tpu.memory_space<vmem>>, %arg3: memref<4x4xbf16, #tpu.memory_space<vmem>>, %arg4: memref<1xf32, #tpu.memory_space<smem>>, %arg5: memref<1x4x256xf32, #tpu.memory_space<vmem>>) attributes {dimension_semantics = [#tpu.dimension_semantics<parallel>], iteration_bounds = array<i64: 2>, scalar_prefetch = 0 : i64, scratch_operands = 0 : i64, tpu.core_type = #tpu.core_type<tc>, window_params = [{transform_indices = @transform_0, window_bounds = array<i64: 1, 4, 256>}, {transform_indices = @transform_1, window_bounds = array<i64: 1, 4, 256>}, {pipeline_mode = #tpu.pipeline_mode<synchronous>, transform_indices = @transform_2, window_bounds = array<i64: 4, 4>}, {transform_indices = @transform_3, window_bounds = array<i64: 1>}, {transform_indices = @transform_4, window_bounds = array<i64: 1, 4, 256>}]} {
    %c0 = arith.constant 0 : index
    %c0_0 = arith.constant 0 : index
    %0 = vector.load %arg3[%c0, %c0_0] : memref<4x4xbf16, #tpu.memory_space<vmem>>, vector<4x4xbf16>
    %c0_1 = arith.constant 0 : index
    %1 = memref.load %arg4[%c0_1] : memref<1xf32, #tpu.memory_space<smem>>
    %c0_2 = arith.constant 0 : index
    %c0_3 = arith.constant 0 : index
    %c0_4 = arith.constant 0 : index
    %2 = vector.load %arg1[%c0_2, %c0_3, %c0_4] : memref<1x4x256xbf16, #tpu.memory_space<vmem>>, vector<1x4x256xbf16>
    %3 = vector.shape_cast %2 : vector<1x4x256xbf16> to vector<4x256xbf16>
    %cst = arith.constant dense<0.000000e+00> : vector<4x256xf32>
    %4 = tpu.matmul %0, %3, %cst {dimension_numbers = #tpu.dot_dimension_numbers<[1], [0], [0], [1], [0, 0, 1, 1], [], []>} : vector<4x4xbf16>, vector<4x256xbf16>, vector<4x256xf32> -> vector<4x256xf32>
    %5 = vector.broadcast %1 : f32 to vector<4x256xf32>
    %6 = arith.mulf %4, %5 : vector<4x256xf32>
    %c0_5 = arith.constant 0 : index
    %c0_6 = arith.constant 0 : index
    %c0_7 = arith.constant 0 : index
    %7 = vector.load %arg2[%c0_5, %c0_6, %c0_7] : memref<1x4x256xf32, #tpu.memory_space<vmem>>, vector<1x4x256xf32>
    %8 = vector.shape_cast %7 : vector<1x4x256xf32> to vector<4x256xf32>
    %9 = arith.addf %6, %8 : vector<4x256xf32>
    %c0_8 = arith.constant 0 : index
    %c0_9 = arith.constant 0 : index
    %c0_10 = arith.constant 0 : index
    %10 = vector.load %arg5[%c0_8, %c0_9, %c0_10] : memref<1x4x256xf32, #tpu.memory_space<vmem>>, vector<1x4x256xf32>
    %11 = vector.shape_cast %10 : vector<1x4x256xf32> to vector<4x256xf32>
    %12 = vector.shape_cast %9 : vector<4x256xf32> to vector<1x4x256xf32>
    tpu.vector_store %arg5[%c0_8, %c0_9, %c0_10], %12 {strides = array<i32>} : memref<1x4x256xf32, #tpu.memory_space<vmem>>, vector<1x4x256xf32>,
    return
  }
  func.func @transform_0(%arg0: i32) -> (i32, i32, i32) {
    %c0_i32 = arith.constant 0 : i32
    %c0_i32_0 = arith.constant 0 : i32
    %c0_i32_1 = arith.constant 0 : i32
    return %arg0, %c0_i32, %c0_i32_0 : i32, i32, i32
  }
  func.func @transform_1(%arg0: i32) -> (i32, i32, i32) {
    %c0_i32 = arith.constant 0 : i32
    %c0_i32_0 = arith.constant 0 : i32
    %c0_i32_1 = arith.constant 0 : i32
    return %arg0, %c0_i32, %c0_i32_0 : i32, i32, i32
  }
  func.func @transform_2(%arg0: i32) -> (i32, i32) {
    %c0_i32 = arith.constant 0 : i32
    %c0_i32_0 = arith.constant 0 : i32
    %c0_i32_1 = arith.constant 0 : i32
    return %c0_i32, %c0_i32_0 : i32, i32
  }
  func.func @transform_3(%arg0: i32) -> i32 {
    %c0_i32 = arith.constant 0 : i32
    %c0_i32_0 = arith.constant 0 : i32
    return %c0_i32 : i32
  }
  func.func @transform_4(%arg0: i32) -> (i32, i32, i32) {
    %c0_i32 = arith.constant 0 : i32
    %c0_i32_0 = arith.constant 0 : i32
    %c0_i32_1 = arith.constant 0 : i32
    return %arg0, %c0_i32, %c0_i32_0 : i32, i32, i32
  }
}

</mosaic_0001>

<llo_original>
// kernel: cam_forward.3
$region0: #{cam_forward.3}
  #allocation0 [shape = 'u32[]', space=smem, size = 0x4, offset = 0x4, fixed_abs, tag = 'smem constant byte address 0x4 - core index']
  #allocation1 [shape = 'u32[72,128]{1,0:T(1,128)}', space=vmem, size = 0x9000, scoped, tag = 'internal scratch']
  #allocation2 [shape = 'f32[1]{0:T(128)S(6)}', space=smem, size = 0x200, scoped, tag = 'scoped memory for cam_forward.3']
  %s0 = inlined_call_operand.vmem [shape: bf16[2,4,256], index: 0, kind: input, shape index: {}]
  %s1 = inlined_call_operand.vmem [shape: f32[2,4,256], index: 1, kind: input, shape index: {}]
  %s2 = inlined_call_operand.vmem [shape: bf16[4,4], index: 2, kind: input, shape index: {}]
  %s3 = inlined_call_operand.<no memory space> [shape: f32[1], index: 3, kind: input, shape index: {}]
  %s4 = inlined_call_operand.vmem [shape: f32[2,4,256], index: 4, kind: output, shape index: {}]
  %s5 = sld [smem:[#allocation0]]
  $region49: #{cam_forward.3} parent=0
    _
  %s7 = ssub.s32 1, %s5
  %s8 = scalar_select 0, %s7, %s5
  %9 = sst [smem:[#allocation2]] %s3
  loop: start=0, step=1, limit=4
  $region2: #{cam_forward.3} parent=0 // loop_pre_header
    _
  $region3: #{cam_forward.3} parent=0 // loop_header
    %s11 = sphi 0, %s15
    %p12 = scmp.ge.s32.totalorder %s11, 4
    %s21 = sphi 0, %s23
    %s24 = sphi 0, %s21
    %s25 = sphi 0, %s24
    %s41 = sphi 0, %s25
    %s47 = sphi 0, %s49
    %s50 = sphi 0, %s47
    %s51 = sphi 0, %s50
    %s67 = sphi 0, %s51
    %s71 = sphi 0, %s71
    %s73 = sphi 0, %s71
    %s74 = sphi 0, %s73
    %s88 = sphi 0, %s74
    %s92 = sphi 0, %s92
    %s94 = sphi 0, %s92
    %s95 = sphi 0, %s94
    %s109 = sphi 0, %s95
    %s115 = sphi 0, %s117
    %s118 = sphi 0, %s115
    %s119 = sphi 0, %s118
    %s135 = sphi 0, %s119
  $region4: #{cam_forward.3} parent=0 // loop_header_branch
    %14 = sbr.rel (%p12) target = $region8
  $region5: #{cam_forward.3} parent=0 // loop_body
    %s16 = ssub.s32 %s11, 1
    %s17 = ssub.s32 %s11, 2
    %s18 = sadd.s32 %s11, 1
    %s19 = ssub.s32 %s11, %s18
    %p20 = scmp.eq.s32.totalorder %s19, 0
    %s22 = sadd.s32 %s21, 1
    %s23 = scalar_select %p20, %s21, %s22
    %p26 = pneg %p20
    %p27 = scmp.eq.s32.totalorder %s11, 1
    %p28 = por %p26, %p27
    %p29 = scmp.ne.s32.totalorder %s21, %s24
    %p30 = scmp.eq.s32.totalorder %s11, 0
    %p31 = por %p29, %p30
    %p32 = scmp.ne.s32.totalorder %s21, %s24
    %p33 = scmp.eq.s32.totalorder %s16, 1
    %p34 = por %p32, %p33
    %p35 = scmp.ne.s32.totalorder %s24, %s25
    %p36 = scmp.eq.s32.totalorder %s16, 0
    %p37 = por %p35, %p36
    %p38 = scmp.ne.s32.totalorder %s24, %s25
    %p39 = scmp.eq.s32.totalorder %s17, 1
    %p40 = por %p38, %p39
    %p42 = scmp.ne.s32.totalorder %s25, %s41
    %p43 = scmp.eq.s32.totalorder %s17, 0
    %p44 = por %p42, %p43
    %s45 = ssub.s32 %s11, %s18
    %p46 = scmp.eq.s32.totalorder %s45, 0
    %s48 = sadd.s32 %s47, 1
    %s49 = scalar_select %p46, %s47, %s48
    %p52 = pneg %p46
    %p53 = scmp.eq.s32.totalorder %s11, 1
    %p54 = por %p52, %p53
    %p55 = scmp.ne.s32.totalorder %s47, %s50
    %p56 = scmp.eq.s32.totalorder %s11, 0
    %p57 = por %p55, %p56
    %p58 = scmp.ne.s32.totalorder %s47, %s50
    %p59 = scmp.eq.s32.totalorder %s16, 1
    %p60 = por %p58, %p59
    %p61 = scmp.ne.s32.totalorder %s50, %s51
    %p62 = scmp.eq.s32.totalorder %s16, 0
    %p63 = por %p61, %p62
    %p64 = scmp.ne.s32.totalorder %s50, %s51
    %p65 = scmp.eq.s32.totalorder %s17, 1
    %p66 = por %p64, %p65
    %p68 = scmp.ne.s32.totalorder %s51, %s67
    %p69 = scmp.eq.s32.totalorder %s17, 0
    %p70 = por %p68, %p69
    %s72 = sadd.s32 %s71, 1
    %p75 = scmp.eq.s32.totalorder %s11, 1
    %p76 = scmp.ne.s32.totalorder %s71, %s73
    %p77 = scmp.eq.s32.totalorder %s11, 0
    %p78 = por %p76, %p77
    %p79 = scmp.ne.s32.totalorder %s71, %s73
    %p80 = scmp.eq.s32.totalorder %s16, 1
    %p81 = por %p79, %p80
    %p82 = scmp.ne.s32.totalorder %s73, %s74
    %p83 = scmp.eq.s32.totalorder %s16, 0
    %p84 = por %p82, %p83
    %p85 = scmp.ne.s32.totalorder %s73, %s74
    %p86 = scmp.eq.s32.totalorder %s17, 1
    %p87 = por %p85, %p86
    %p89 = scmp.ne.s32.totalorder %s74, %s88
    %p90 = scmp.eq.s32.totalorder %s17, 0
    %p91 = por %p89, %p90
    %s93 = sadd.s32 %s92, 1
    %p96 = scmp.eq.s32.totalorder %s11, 1
    %p97 = scmp.ne.s32.totalorder %s92, %s94
    %p98 = scmp.eq.s32.totalorder %s11, 0
    %p99 = por %p97, %p98
    %p100 = scmp.ne.s32.totalorder %s92, %s94
    %p101 = scmp.eq.s32.totalorder %s16, 1
    %p102 = por %p100, %p101
    %p103 = scmp.ne.s32.totalorder %s94, %s95
    %p104 = scmp.eq.s32.totalorder %s16, 0
    %p105 = por %p103, %p104
    %p106 = scmp.ne.s32.totalorder %s94, %s95
    %p107 = scmp.eq.s32.totalorder %s17, 1
    %p108 = por %p106, %p107
    %p110 = scmp.ne.s32.totalorder %s95, %s109
    %p111 = scmp.eq.s32.totalorder %s17, 0
    %p112 = por %p110, %p111
    %s113 = ssub.s32 %s11, %s18
    %p114 = scmp.eq.s32.totalorder %s113, 0
    %s116 = sadd.s32 %s115, 1
    %s117 = scalar_select %p114, %s115, %s116
    %p120 = pneg %p114
    %p121 = scmp.eq.s32.totalorder %s11, 1
    %p122 = por %p120, %p121
    %p123 = scmp.ne.s32.totalorder %s115, %s118
    %p124 = scmp.eq.s32.totalorder %s11, 0
    %p125 = por %p123, %p124
    %p126 = scmp.ne.s32.totalorder %s115, %s118
    %p127 = scmp.eq.s32.totalorder %s16, 1
    %p128 = por %p126, %p127
    %p129 = scmp.ne.s32.totalorder %s118, %s119
    %p130 = scmp.eq.s32.totalorder %s16, 0
    %p131 = por %p129, %p130
    %p132 = scmp.ne.s32.totalorder %s118, %s119
    %p133 = scmp.eq.s32.totalorder %s17, 1
    %p134 = por %p132, %p133
    %p136 = scmp.ne.s32.totalorder %s119, %s135
    %p137 = scmp.eq.s32.totalorder %s17, 0
    %p138 = por %p136, %p137
    %p139 = scmp.le.s32.totalorder 1, %s11
    %p140 = scmp.lt.s32.totalorder %s11, 3
    %p141 = pnand %p139, %p140
    %p142 = pneg %p141
    // Predicated region
    $region9: #{cam_forward.3} parent=5 // pred_check
      _
    $region10: #{cam_forward.3} parent=5 // pred_check_branch
      %144 = sbr.rel (%p141) target = $region12
    $region11: #{cam_forward.3} parent=5 // pred_region
      %s145 = ssub.s32 %s11, 1
      // Predicated region
      $region13: #{cam_forward.3} parent=11 // pred_check
        %p146 = pneg %p84
      $region14: #{cam_forward.3} parent=11 // pred_check_branch
        %148 = sbr.rel (%p146) target = $region16
      $region15: #{cam_forward.3} parent=11 // pred_region
        _
      $region16: #{cam_forward.3} parent=11 // pred_fallthru
        _
      // Predicated region
      $region17: #{cam_forward.3} parent=11 // pred_check
        %p149 = pneg %p105
      $region18: #{cam_forward.3} parent=11 // pred_check_branch
        %151 = sbr.rel (%p149) target = $region20
      $region19: #{cam_forward.3} parent=11 // pred_region
        _
      $region20: #{cam_forward.3} parent=11 // pred_fallthru
        _
    $region12: #{cam_forward.3} parent=5 // pred_fallthru
      _
    %p152 = scmp.lt.s32.totalorder %s11, 2
    // Predicated region
    $region21: #{cam_forward.3} parent=5 // pred_check
      %p153 = pneg %p152
    $region22: #{cam_forward.3} parent=5 // pred_check_branch
      %155 = sbr.rel (%p153) target = $region24
    $region23: #{cam_forward.3} parent=5 // pred_region
      // Predicated region
      $region25: #{cam_forward.3} parent=23 // pred_check
        %p156 = pneg %p31
      $region26: #{cam_forward.3} parent=23 // pred_check_branch
        %158 = sbr.rel (%p156) target = $region28
      $region27: #{cam_forward.3} parent=23 // pred_region
        %p159 = scmp.lt.s32.totalorder %s11, 1
        %s160 = scalar_select %p159, %s11, 1
        %s161 = smul.addr %s160, 2
        %s162 = smul.addr %s161, 2
        %s163 = scalar_lea.vmem %s0, %s162
      $region28: #{cam_forward.3} parent=23 // pred_fallthru
        _
      // Predicated region
      $region29: #{cam_forward.3} parent=23 // pred_check
        %p164 = pneg %p57
      $region30: #{cam_forward.3} parent=23 // pred_check_branch
        %166 = sbr.rel (%p164) target = $region32
      $region31: #{cam_forward.3} parent=23 // pred_region
        %p167 = scmp.lt.s32.totalorder %s11, 1
        %s168 = scalar_select %p167, %s11, 1
        %s169 = smul.addr %s168, 2
        %s170 = smul.addr %s169, 4
        %s171 = scalar_lea.vmem %s1, %s170
      $region32: #{cam_forward.3} parent=23 // pred_fallthru
        _
    $region24: #{cam_forward.3} parent=5 // pred_fallthru
      _
    %p172 = scmp.le.s32.totalorder 1, %s11
    %p173 = scmp.lt.s32.totalorder %s11, 3
    %p174 = pnand %p172, %p173
    %p175 = pneg %p174
    // Predicated region
    $region33: #{cam_forward.3} parent=5 // pred_check
      _
    $region34: #{cam_forward.3} parent=5 // pred_check_branch
      %177 = sbr.rel (%p174) target = $region36
    $region35: #{cam_forward.3} parent=5 // pred_region
      %s178 = ssub.s32 %s11, 1
      %p179 = scmp.lt.s32.totalorder %s16, 1
      %s180 = scalar_select %p179, %s16, 1
      %s181 = smul.addr %s180, 2
      %s182 = smul.addr %s181, 2
      %s183 = scalar_lea.vmem %s0, %s182
      %p184 = pneg %p37
      %p185 = pneg %p34
      %p186 = scmp.lt.s32.totalorder %s16, 1
      %s187 = scalar_select %p186, %s16, 1
      %s188 = smul.addr %s187, 2
      %s189 = smul.addr %s188, 4
      %s190 = scalar_lea.vmem %s1, %s189
      %p191 = pneg %p63
      %p192 = pneg %p60
      %p193 = pneg %p84
      %p194 = pneg %p81
      %p195 = pneg %p105
      %p196 = pneg %p102
      %p197 = pneg %p131
      %p198 = pneg %p128
      %p199 = scmp.lt.s32.totalorder %s16, 1
      %s200 = scalar_select %p199, %s16, 1
      %s201 = smul.addr %s200, 2
      %s202 = smul.addr %s201, 4
      %s203 = scalar_lea.vmem %s4, %s202
      %p204 = scmp.lt.s32.totalorder %s16, 1
      %s205 = scalar_select %p204, %s16, 1
      %s206 = smul.addr %s205, 2
      %s207 = smul.addr %s206, 2
      %s208 = scalar_lea.vmem %s0, %s207
      %p209 = scmp.lt.s32.totalorder %s16, 1
      %s210 = scalar_select %p209, %s16, 1
      %s211 = smul.addr %s210, 2
      %s212 = smul.addr %s211, 4
      %s213 = scalar_lea.vmem %s1, %s212
      %p214 = scmp.lt.s32.totalorder %s16, 1
      %s215 = scalar_select %p214, %s16, 1
      %s216 = smul.addr %s215, 2
      %s217 = smul.addr %s216, 4
      %s218 = scalar_lea.vmem %s4, %s217
      %v220 = vld [vmem:[%s2] sm:$0x3]
      %s221 = sld [smem:[#allocation2]]
      %v222 = vld [vmem:[%s208] sm:$0xf]
      %224 = vst [vmem:[#allocation1] ss:$4 sm:$0xff] %v222
      %v225 = vld.sshfl [vmem:[#allocation1] sm:$0xff pattern:$0x73625140]
      %v226 = vld.sshfl [vmem:[#allocation1 + $0x8] sm:$0xff pattern:$0x73625140]
      %vm227 = vcmask 31744
      %v229 = vsel %vm227, %v220, 0
      %vm231 = vcmask 1041408
      %v232 = vsel %vm231, %v225, 0
      %v234 = vsel %vm231, %v226, 0
      %236 = vmatpush.bf16.msra.mxu0 0
      %237 = vmatpush.bf16.msra.mxu0 0
      %238 = vmatpush.bf16.msra.mxu0 0
      %239 = vmatpush.bf16.msra.mxu0 0
      %240 = vmatpush.bf16.msra.mxu0 0
      %241 = vmatpush.bf16.msra.mxu0 0
      %242 = vmatpush.bf16.msra.mxu0 0
      %243 = vmatpush.bf16.msra.mxu0 %v232
      %244 = vmatmul.bf16.gmra.mxu0 %v229
      %v245 = vpop.f32.mrf.mxu0
      %v246 = vadd.f32 0.0, %v245
      %v247 = vpop.f32.mrf.mxu0
      %248 = vdwg.mxu0
      %249 = vmatpush.bf16.msra.mxu0 0
      %250 = vmatpush.bf16.msra.mxu0 0
      %251 = vmatpush.bf16.msra.mxu0 0
      %252 = vmatpush.bf16.msra.mxu0 0
      %253 = vmatpush.bf16.msra.mxu0 0
      %254 = vmatpush.bf16.msra.mxu0 0
      %255 = vmatpush.bf16.msra.mxu0 0
      %256 = vmatpush.bf16.msra.mxu0 %v234
      %257 = vmatmul.bf16.gmra.mxu0 %v229
      %v258 = vpop.f32.mrf.mxu0
      %v259 = vadd.f32 0.0, %v258
      %v260 = vpop.f32.mrf.mxu0
      %261 = vdwg.mxu0
      %v262 = vstv %s221
      %v263 = vmul.f32 %v246, %v262
      %v264 = vmul.f32 %v259, %v262
      %v265 = vld [vmem:[%s213] sm:$0xff]
      %267 = vst [vmem:[#allocation1] ss:$2 sm:$0xff] %v265
      %v268 = vld.sshfl [vmem:[#allocation1] sm:$0xff pattern:$0x75316420]
      %v269 = vld.sshfl [vmem:[#allocation1 + $0x8] sm:$0xff pattern:$0x75316420]
      %v272 = vadd.f32 %v263, %v268
      %v273 = vadd.f32 %v264, %v269
      %v276 = vrot.slane %v273, 4
      %vm277 = vcmask 1043456
      %v278 = vsel %vm277, %v272, %v276
      %280 = vst [vmem:[%s218] sm:$0xff] %v278
      %p281 = scmp.lt.s32.totalorder %s16, 1
      %s282 = scalar_select %p281, %s16, 1
      %s283 = smul.addr %s282, 2
      %s284 = smul.addr %s283, 4
      %s285 = scalar_lea.vmem %s4, %s284
      // Predicated region
      $region37: #{cam_forward.3} parent=35 // pred_check
        %p286 = pneg %p128
      $region38: #{cam_forward.3} parent=35 // pred_check_branch
        %288 = sbr.rel (%p286) target = $region40
      $region39: #{cam_forward.3} parent=35 // pred_region
        _
      $region40: #{cam_forward.3} parent=35 // pred_fallthru
        _
    $region36: #{cam_forward.3} parent=5 // pred_fallthru
      _
    %p289 = scmp.le.s32.totalorder 2, %s11
    // Predicated region
    $region41: #{cam_forward.3} parent=5 // pred_check
      %p290 = pneg %p289
    $region42: #{cam_forward.3} parent=5 // pred_check_branch
      %292 = sbr.rel (%p290) target = $region44
    $region43: #{cam_forward.3} parent=5 // pred_region
      %s293 = ssub.s32 %s11, 2
      // Predicated region
      $region45: #{cam_forward.3} parent=43 // pred_check
        %p294 = pneg %p134
      $region46: #{cam_forward.3} parent=43 // pred_check_branch
        %296 = sbr.rel (%p294) target = $region48
      $region47: #{cam_forward.3} parent=43 // pred_region
        %p297 = scmp.lt.s32.totalorder %s17, 1
        %s298 = scalar_select %p297, %s17, 1
        %s299 = smul.addr %s298, 2
        %s300 = smul.addr %s299, 4
        %s301 = scalar_lea.vmem %s4, %s300
      $region48: #{cam_forward.3} parent=43 // pred_fallthru
        _
    $region44: #{cam_forward.3} parent=5 // pred_fallthru
      _
  $region6: #{cam_forward.3} parent=0 // loop_footer
    %s15 = sadd.s32 1, %s11
  $region7: #{cam_forward.3} parent=0 // loop_footer_branch
    %10 = sbr.rel target = $region3
  $region8: #{cam_forward.3} parent=0 // loop_exit
    _

// kernel: cam_forward.2
$region0: #{cam_forward.2}
  #allocation0 [shape = 'u32[]', space=smem, size = 0x4, offset = 0x4, fixed_abs, tag = 'smem constant byte address 0x4 - core index']
  #allocation1 [shape = 'u32[72,128]{1,0:T(1,128)}', space=vmem, size = 0x9000, scoped, tag = 'internal scratch']
  %s0 = inlined_call_operand.vmem [shape: f32[2,4,256], index: 0, kind: input, shape index: {}]
  %s1 = inlined_call_operand.vmem [shape: bf16[24,4], index: 1, kind: input, shape index: {}]
  %s2 = inlined_call_operand.vmem [shape: bf16[2,256,4], index: 2, kind: output, shape index: {}]
  %s3 = sld [smem:[#allocation0]]
  $region41: #{cam_forward.2} parent=0
    _
  %s5 = ssub.s32 1, %s3
  %s6 = scalar_select 0, %s5, %s3
  loop: start=0, step=1, limit=4
  $region2: #{cam_forward.2} parent=0 // loop_pre_header
    _
  $region3: #{cam_forward.2} parent=0 // loop_header
    %s8 = sphi 0, %s12
    %p9 = scmp.ge.s32.totalorder %s8, 4
    %s18 = sphi 0, %s20
    %s21 = sphi 0, %s18
    %s22 = sphi 0, %s21
    %s38 = sphi 0, %s22
    %s42 = sphi 0, %s42
    %s44 = sphi 0, %s42
    %s45 = sphi 0, %s44
    %s59 = sphi 0, %s45
    %s65 = sphi 0, %s67
    %s68 = sphi 0, %s65
    %s69 = sphi 0, %s68
    %s85 = sphi 0, %s69
  $region4: #{cam_forward.2} parent=0 // loop_header_branch
    %11 = sbr.rel (%p9) target = $region8
  $region5: #{cam_forward.2} parent=0 // loop_body
    %s13 = ssub.s32 %s8, 1
    %s14 = ssub.s32 %s8, 2
    %s15 = sadd.s32 %s8, 1
    %s16 = ssub.s32 %s8, %s15
    %p17 = scmp.eq.s32.totalorder %s16, 0
    %s19 = sadd.s32 %s18, 1
    %s20 = scalar_select %p17, %s18, %s19
    %p23 = pneg %p17
    %p24 = scmp.eq.s32.totalorder %s8, 1
    %p25 = por %p23, %p24
    %p26 = scmp.ne.s32.totalorder %s18, %s21
    %p27 = scmp.eq.s32.totalorder %s8, 0
    %p28 = por %p26, %p27
    %p29 = scmp.ne.s32.totalorder %s18, %s21
    %p30 = scmp.eq.s32.totalorder %s13, 1
    %p31 = por %p29, %p30
    %p32 = scmp.ne.s32.totalorder %s21, %s22
    %p33 = scmp.eq.s32.totalorder %s13, 0
    %p34 = por %p32, %p33
    %p35 = scmp.ne.s32.totalorder %s21, %s22
    %p36 = scmp.eq.s32.totalorder %s14, 1
    %p37 = por %p35, %p36
    %p39 = scmp.ne.s32.totalorder %s22, %s38
    %p40 = scmp.eq.s32.totalorder %s14, 0
    %p41 = por %p39, %p40
    %s43 = sadd.s32 %s42, 1
    %p46 = scmp.eq.s32.totalorder %s8, 1
    %p47 = scmp.ne.s32.totalorder %s42, %s44
    %p48 = scmp.eq.s32.totalorder %s8, 0
    %p49 = por %p47, %p48
    %p50 = scmp.ne.s32.totalorder %s42, %s44
    %p51 = scmp.eq.s32.totalorder %s13, 1
    %p52 = por %p50, %p51
    %p53 = scmp.ne.s32.totalorder %s44, %s45
    %p54 = scmp.eq.s32.totalorder %s13, 0
    %p55 = por %p53, %p54
    %p56 = scmp.ne.s32.totalorder %s44, %s45
    %p57 = scmp.eq.s32.totalorder %s14, 1
    %p58 = por %p56, %p57
    %p60 = scmp.ne.s32.totalorder %s45, %s59
    %p61 = scmp.eq.s32.totalorder %s14, 0
    %p62 = por %p60, %p61
    %s63 = ssub.s32 %s8, %s15
    %p64 = scmp.eq.s32.totalorder %s63, 0
    %s66 = sadd.s32 %s65, 1
    %s67 = scalar_select %p64, %s65, %s66
    %p70 = pneg %p64
    %p71 = scmp.eq.s32.totalorder %s8, 1
    %p72 = por %p70, %p71
    %p73 = scmp.ne.s32.totalorder %s65, %s68
    %p74 = scmp.eq.s32.totalorder %s8, 0
    %p75 = por %p73, %p74
    %p76 = scmp.ne.s32.totalorder %s65, %s68
    %p77 = scmp.eq.s32.totalorder %s13, 1
    %p78 = por %p76, %p77
    %p79 = scmp.ne.s32.totalorder %s68, %s69
    %p80 = scmp.eq.s32.totalorder %s13, 0
    %p81 = por %p79, %p80
    %p82 = scmp.ne.s32.totalorder %s68, %s69
    %p83 = scmp.eq.s32.totalorder %s14, 1
    %p84 = por %p82, %p83
    %p86 = scmp.ne.s32.totalorder %s69, %s85
    %p87 = scmp.eq.s32.totalorder %s14, 0
    %p88 = por %p86, %p87
    %p89 = scmp.le.s32.totalorder 1, %s8
    %p90 = scmp.lt.s32.totalorder %s8, 3
    %p91 = pnand %p89, %p90
    %p92 = pneg %p91
    // Predicated region
    $region9: #{cam_forward.2} parent=5 // pred_check
      _
    $region10: #{cam_forward.2} parent=5 // pred_check_branch
      %94 = sbr.rel (%p91) target = $region12
    $region11: #{cam_forward.2} parent=5 // pred_region
      %s95 = ssub.s32 %s8, 1
      // Predicated region
      $region13: #{cam_forward.2} parent=11 // pred_check
        %p96 = pneg %p55
      $region14: #{cam_forward.2} parent=11 // pred_check_branch
        %98 = sbr.rel (%p96) target = $region16
      $region15: #{cam_forward.2} parent=11 // pred_region
        _
      $region16: #{cam_forward.2} parent=11 // pred_fallthru
        _
    $region12: #{cam_forward.2} parent=5 // pred_fallthru
      _
    %p99 = scmp.lt.s32.totalorder %s8, 2
    // Predicated region
    $region17: #{cam_forward.2} parent=5 // pred_check
      %p100 = pneg %p99
    $region18: #{cam_forward.2} parent=5 // pred_check_branch
      %102 = sbr.rel (%p100) target = $region20
    $region19: #{cam_forward.2} parent=5 // pred_region
      // Predicated region
      $region21: #{cam_forward.2} parent=19 // pred_check
        %p103 = pneg %p28
      $region22: #{cam_forward.2} parent=19 // pred_check_branch
        %105 = sbr.rel (%p103) target = $region24
      $region23: #{cam_forward.2} parent=19 // pred_region
        %p106 = scmp.lt.s32.totalorder %s8, 1
        %s107 = scalar_select %p106, %s8, 1
        %s108 = smul.addr %s107, 2
        %s109 = smul.addr %s108, 4
        %s110 = scalar_lea.vmem %s0, %s109
      $region24: #{cam_forward.2} parent=19 // pred_fallthru
        _
    $region20: #{cam_forward.2} parent=5 // pred_fallthru
      _
    %p111 = scmp.le.s32.totalorder 1, %s8
    %p112 = scmp.lt.s32.totalorder %s8, 3
    %p113 = pnand %p111, %p112
    %p114 = pneg %p113
    // Predicated region
    $region25: #{cam_forward.2} parent=5 // pred_check
      _
    $region26: #{cam_forward.2} parent=5 // pred_check_branch
      %116 = sbr.rel (%p113) target = $region28
    $region27: #{cam_forward.2} parent=5 // pred_region
      %s117 = ssub.s32 %s8, 1
      %p118 = scmp.lt.s32.totalorder %s13, 1
      %s119 = scalar_select %p118, %s13, 1
      %s120 = smul.addr %s119, 2
      %s121 = smul.addr %s120, 4
      %s122 = scalar_lea.vmem %s0, %s121
      %p123 = pneg %p34
      %p124 = pneg %p31
      %p125 = pneg %p55
      %p126 = pneg %p52
      %p127 = pneg %p81
      %p128 = pneg %p78
      %p129 = scmp.lt.s32.totalorder %s13, 1
      %s130 = scalar_select %p129, %s13, 1
      %s131 = smul.addr %s130, 32
      %s132 = smul.addr %s131, 4
      %s133 = scalar_lea.vmem %s2, %s132
      %p134 = scmp.lt.s32.totalorder %s13, 1
      %s135 = scalar_select %p134, %s13, 1
      %s136 = smul.addr %s135, 2
      %s137 = smul.addr %s136, 4
      %s138 = scalar_lea.vmem %s0, %s137
      %p139 = scmp.lt.s32.totalorder %s13, 1
      %s140 = scalar_select %p139, %s13, 1
      %s141 = smul.addr %s140, 32
      %s142 = smul.addr %s141, 4
      %s143 = scalar_lea.vmem %s2, %s142
      %v145 = vld [vmem:[%s1] sm:$0xf]
      %v146 = vld [vmem:[%s1 + $0x4] sm:$0xf]
      %v147 = vld [vmem:[%s1 + $0x8] sm:$0xf]
      %v148 = vld [vmem:[%s138] sm:$0xff]
      %150 = vst [vmem:[#allocation1] ss:$2 sm:$0xff] %v148
      %v151 = vld.sshfl [vmem:[#allocation1] sm:$0xff pattern:$0x75316420]
      %v152 = vld.sshfl [vmem:[#allocation1 + $0x8] sm:$0xff pattern:$0x75316420]
      %v155 = vpack.c.bf16 %v151, %v151
      %v156 = vpack.c.bf16 %v152, %v152
      %v160 = vunpack.c.l.b16 %v145
      %v161 = vunpack.c.l.b16 %v146
      %v162 = vunpack.c.l.b16 %v147
      %v163 = vpack.c.b16 %v161, %v160
      %v164 = vpack.c.b16 %v162, %v162
      %vm165 = vcmask 31744
      %v167 = vsel %vm165, %v163, 0
      %v170 = vsel %vm165, %v164, 0
      %vm172 = vcmask 1041408
      %v174 = vsel %vm172, %v155, 0
      %v177 = vsel %vm172, %v156, 0
      %179 = vmatpush.bf16.msra.mxu0 0
      %180 = vmatpush.bf16.msra.mxu0 0
      %181 = vmatpush.bf16.msra.mxu0 0
      %182 = vmatpush.bf16.msra.mxu0 0
      %183 = vmatpush.bf16.msra.mxu0 0
      %184 = vmatpush.bf16.msra.mxu0 0
      %185 = vmatpush.bf16.msra.mxu0 0
      %186 = vmatpush.bf16.msra.mxu0 %v174
      %187 = vmatmul.bf16.gmra.mxu0 %v167
      %v188 = vpop.f32.mrf.mxu0
      %v189 = vadd.f32 0.0, %v188
      %v190 = vpop.f32.mrf.mxu0
      %v191 = vadd.f32 0.0, %v190
      %192 = vmatmul.bf16.gmra.mxu0 %v170
      %v193 = vpop.f32.mrf.mxu0
      %v194 = vadd.f32 0.0, %v193
      %v195 = vpop.f32.mrf.mxu0
      %196 = vdwg.mxu0
      %197 = vmatpush.bf16.msra.mxu0 0
      %198 = vmatpush.bf16.msra.mxu0 0
      %199 = vmatpush.bf16.msra.mxu0 0
      %200 = vmatpush.bf16.msra.mxu0 0
      %201 = vmatpush.bf16.msra.mxu0 0
      %202 = vmatpush.bf16.msra.mxu0 0
      %203 = vmatpush.bf16.msra.mxu0 0
      %204 = vmatpush.bf16.msra.mxu0 %v177
      %205 = vmatmul.bf16.gmra.mxu0 %v167
      %v206 = vpop.f32.mrf.mxu0
      %v207 = vadd.f32 0.0, %v206
      %v208 = vpop.f32.mrf.mxu0
      %v209 = vadd.f32 0.0, %v208
      %210 = vmatmul.bf16.gmra.mxu0 %v170
      %v211 = vpop.f32.mrf.mxu0
      %v212 = vadd.f32 0.0, %v211
      %v213 = vpop.f32.mrf.mxu0
      %214 = vdwg.mxu0
      %215 = vmatpush.xpose.msra.mxu0 0.0
      %216 = vmatpush.xpose.msra.mxu0 0.0
      %217 = vmatpush.xpose.msra.mxu0 0.0
      %218 = vmatpush.xpose.msra.mxu0 0.0
      %219 = vmatpush.xpose.msra.mxu0 0.0
      %220 = vmatpush.xpose.msra.mxu0 0.0
      %221 = vmatpush.xpose.msra.mxu0 0.0
      %222 = vmatpush.xpose.msra.mxu0 0.0
      %223 = vmatpush.xpose.msra.mxu0 0.0
      %224 = vmatpush.xpose.msra.mxu0 0.0
      %225 = vmatpush.xpose.msra.mxu0 0.0
      %226 = vmatpush.xpose.msra.mxu0 0.0
      %227 = vmatpush.xpose.msra.mxu0 0.0
      %228 = vmatpush.xpose.msra.mxu0 0.0
      %229 = vmatpush.xpose.msra.mxu0 0.0
      %230 = vmatpush.xpose.msra.mxu0 %v191
      %231 = vmatmul.f32.gmra.mxu0 %v189
      %v232 = vpop.f32.mrf.mxu0
      %v233 = vadd.f32 0.0, %v232
      %234 = vdwg.mxu0
      %235 = vmatpush.xpose.msra.mxu0 0.0
      %236 = vmatpush.xpose.msra.mxu0 0.0
      %237 = vmatpush.xpose.msra.mxu0 0.0
      %238 = vmatpush.xpose.msra.mxu0 0.0
      %239 = vmatpush.xpose.msra.mxu0 0.0
      %240 = vmatpush.xpose.msra.mxu0 0.0
      %241 = vmatpush.xpose.msra.mxu0 0.0
      %242 = vmatpush.xpose.msra.mxu0 0.0
      %243 = vmatpush.xpose.msra.mxu0 0.0
      %244 = vmatpush.xpose.msra.mxu0 0.0
      %245 = vmatpush.xpose.msra.mxu0 0.0
      %246 = vmatpush.xpose.msra.mxu0 0.0
      %247 = vmatpush.xpose.msra.mxu0 0.0
      %248 = vmatpush.xpose.msra.mxu0 0.0
      %249 = vmatpush.xpose.msra.mxu0 0.0
      %250 = vmatpush.xpose.msra.mxu0 %v209
      %251 = vmatmul.f32.gmra.mxu0 %v207
      %v252 = vpop.f32.mrf.mxu0
      %v253 = vadd.f32 %v233, %v252
      %254 = vdwg.mxu0
      %vm255 = vcmask 27648
      %v256 = vsel %vm255, %v253, -inf
      %257 = vmax.xlane.f32.xlu0 %v256
      %v258 = vpop.xlane.xlu0 %257
      %v259 = vsub.f32 %v253, %v258
      %v260 = vmul.f32 %v259, 1.442695
      %v261 = vpow.pop %v260
      %v262 = vsel %vm255, %v261, 0.0
      %263 = vadd.xlane.f32.xlu0 %v262
      %v264 = vpop.xlane.xlu0 %263
      %v265 = vrcp.pop %v264
      %v266 = vmul.f32 %v261, %v265
      %v268 = vsel %vm165, %v266, 0
      %vm270 = vcmask 1043456
      %v272 = vsel %vm270, %v194, 0
      %v275 = vsel %vm270, %v212, 0
      %277 = vmatpush.msra.mxu0 0.0
      %278 = vmatpush.msra.mxu0 0.0
      %279 = vmatpush.msra.mxu0 0.0
      %280 = vmatpush.msra.mxu0 0.0
      %281 = vmatpush.msra.mxu0 0.0
      %282 = vmatpush.msra.mxu0 0.0
      %283 = vmatpush.msra.mxu0 0.0
      %284 = vmatpush.msra.mxu0 0.0
      %285 = vmatpush.msra.mxu0 0.0
      %286 = vmatpush.msra.mxu0 0.0
      %287 = vmatpush.msra.mxu0 0.0
      %288 = vmatpush.msra.mxu0 0.0
      %289 = vmatpush.msra.mxu0 0.0
      %290 = vmatpush.msra.mxu0 0.0
      %291 = vmatpush.msra.mxu0 0.0
      %292 = vmatpush.msra.mxu0 %v272
      %293 = vmatmul.f32.gmra.mxu0 %v268
      %v294 = vpop.f32.mrf.mxu0
      %v295 = vadd.f32 0.0, %v294
      %296 = vdwg.mxu0
      %297 = vmatpush.msra.mxu0 0.0
      %298 = vmatpush.msra.mxu0 0.0
      %299 = vmatpush.msra.mxu0 0.0
      %300 = vmatpush.msra.mxu0 0.0
      %301 = vmatpush.msra.mxu0 0.0
      %302 = vmatpush.msra.mxu0 0.0
      %303 = vmatpush.msra.mxu0 0.0
      %304 = vmatpush.msra.mxu0 0.0
      %305 = vmatpush.msra.mxu0 0.0
      %306 = vmatpush.msra.mxu0 0.0
      %307 = vmatpush.msra.mxu0 0.0
      %308 = vmatpush.msra.mxu0 0.0
      %309 = vmatpush.msra.mxu0 0.0
      %310 = vmatpush.msra.mxu0 0.0
      %311 = vmatpush.msra.mxu0 0.0
      %312 = vmatpush.msra.mxu0 %v275
      %313 = vmatmul.f32.gmra.mxu0 %v268
      %v314 = vpop.f32.mrf.mxu0
      %v315 = vadd.f32 0.0, %v314
      %316 = vdwg.mxu0
      %317 = vxpose.xlu0.b32.start [1/16] %v295, 128
      %318 = vxpose.xlu0.b32.cont [2/16] 0.0, 128
      %319 = vxpose.xlu0.b32.cont [3/16] 0.0, 128
      %320 = vxpose.xlu0.b32.cont [4/16] 0.0, 128
      %321 = vxpose.xlu0.b32.cont [5/16] 0.0, 128
      %322 = vxpose.xlu0.b32.cont [6/16] 0.0, 128
      %323 = vxpose.xlu0.b32.cont [7/16] 0.0, 128
      %324 = vxpose.xlu0.b32.cont [8/16] 0.0, 128
      %325 = vxpose.xlu0.b32.cont [9/16] 0.0, 128
      %326 = vxpose.xlu0.b32.cont [10/16] 0.0, 128
      %327 = vxpose.xlu0.b32.cont [11/16] 0.0, 128
      %328 = vxpose.xlu0.b32.cont [12/16] 0.0, 128
      %329 = vxpose.xlu0.b32.cont [13/16] 0.0, 128
      %330 = vxpose.xlu0.b32.cont [14/16] 0.0, 128
      %331 = vxpose.xlu0.b32.cont [15/16] 0.0, 128
      %332 = vxpose.xlu0.b32.end [16/16] 0.0, 128
      %v333 = vpop.trf.xlu0
      %v334 = vpop.trf.xlu0
      %v335 = vpop.trf.xlu0
      %v336 = vpop.trf.xlu0
      %v337 = vpop.trf.xlu0
      %v338 = vpop.trf.xlu0
      %v339 = vpop.trf.xlu0
      %v340 = vpop.trf.xlu0
      %v341 = vpop.trf.xlu0
      %v342 = vpop.trf.xlu0
      %v343 = vpop.trf.xlu0
      %v344 = vpop.trf.xlu0
      %v345 = vpop.trf.xlu0
      %v346 = vpop.trf.xlu0
      %v347 = vpop.trf.xlu0
      %v348 = vpop.trf.xlu0
      %349 = vxpose.xlu0.b32.start [1/16] %v315, 128
      %350 = vxpose.xlu0.b32.cont [2/16] 0.0, 128
      %351 = vxpose.xlu0.b32.cont [3/16] 0.0, 128
      %352 = vxpose.xlu0.b32.cont [4/16] 0.0, 128
      %353 = vxpose.xlu0.b32.cont [5/16] 0.0, 128
      %354 = vxpose.xlu0.b32.cont [6/16] 0.0, 128
      %355 = vxpose.xlu0.b32.cont [7/16] 0.0, 128
      %356 = vxpose.xlu0.b32.cont [8/16] 0.0, 128
      %357 = vxpose.xlu0.b32.cont [9/16] 0.0, 128
      %358 = vxpose.xlu0.b32.cont [10/16] 0.0, 128
      %359 = vxpose.xlu0.b32.cont [11/16] 0.0, 128
      %360 = vxpose.xlu0.b32.cont [12/16] 0.0, 128
      %361 = vxpose.xlu0.b32.cont [13/16] 0.0, 128
      %362 = vxpose.xlu0.b32.cont [14/16] 0.0, 128
      %363 = vxpose.xlu0.b32.cont [15/16] 0.0, 128
      %364 = vxpose.xlu0.b32.end [16/16] 0.0, 128
      %v365 = vpop.trf.xlu0
      %v366 = vpop.trf.xlu0
      %v367 = vpop.trf.xlu0
      %v368 = vpop.trf.xlu0
      %v369 = vpop.trf.xlu0
      %v370 = vpop.trf.xlu0
      %v371 = vpop.trf.xlu0
      %v372 = vpop.trf.xlu0
      %v373 = vpop.trf.xlu0
      %v374 = vpop.trf.xlu0
      %v375 = vpop.trf.xlu0
      %v376 = vpop.trf.xlu0
      %v377 = vpop.trf.xlu0
      %v378 = vpop.trf.xlu0
      %v379 = vpop.trf.xlu0
      %v380 = vpop.trf.xlu0
      %v381 = vpack.c.bf16 %v333, %v333
      %v382 = vpack.c.bf16 %v334, %v334
      %v383 = vpack.c.bf16 %v335, %v335
      %v384 = vpack.c.bf16 %v336, %v336
      %v385 = vpack.c.bf16 %v337, %v337
      %v386 = vpack.c.bf16 %v338, %v338
      %v387 = vpack.c.bf16 %v339, %v339
      %v388 = vpack.c.bf16 %v340, %v340
      %v389 = vpack.c.bf16 %v341, %v341
      %v390 = vpack.c.bf16 %v342, %v342
      %v391 = vpack.c.bf16 %v343, %v343
      %v392 = vpack.c.bf16 %v344, %v344
      %v393 = vpack.c.bf16 %v345, %v345
      %v394 = vpack.c.bf16 %v346, %v346
      %v395 = vpack.c.bf16 %v347, %v347
      %v396 = vpack.c.bf16 %v348, %v348
      %v397 = vpack.c.bf16 %v365, %v365
      %v398 = vpack.c.bf16 %v366, %v366
      %v399 = vpack.c.bf16 %v367, %v367
      %v400 = vpack.c.bf16 %v368, %v368
      %v401 = vpack.c.bf16 %v369, %v369
      %v402 = vpack.c.bf16 %v370, %v370
      %v403 = vpack.c.bf16 %v371, %v371
      %v404 = vpack.c.bf16 %v372, %v372
      %v405 = vpack.c.bf16 %v373, %v373
      %v406 = vpack.c.bf16 %v374, %v374
      %v407 = vpack.c.bf16 %v375, %v375
      %v408 = vpack.c.bf16 %v376, %v376
      %v409 = vpack.c.bf16 %v377, %v377
      %v410 = vpack.c.bf16 %v378, %v378
      %v411 = vpack.c.bf16 %v379, %v379
      %v412 = vpack.c.bf16 %v380, %v380
      %413 = vst.msk [vmem:[%s143] sm:$0xf] %vm255, %v381
      %414 = vst.msk [vmem:[%s143 + $0x4] sm:$0xf] %vm255, %v382
      %415 = vst.msk [vmem:[%s143 + $0x8] sm:$0xf] %vm255, %v383
      %416 = vst.msk [vmem:[%s143 + $0xc] sm:$0xf] %vm255, %v384
      %417 = vst.msk [vmem:[%s143 + $0x10] sm:$0xf] %vm255, %v385
      %418 = vst.msk [vmem:[%s143 + $0x14] sm:$0xf] %vm255, %v386
      %419 = vst.msk [vmem:[%s143 + $0x18] sm:$0xf] %vm255, %v387
      %420 = vst.msk [vmem:[%s143 + $0x1c] sm:$0xf] %vm255, %v388
      %421 = vst.msk [vmem:[%s143 + $0x20] sm:$0xf] %vm255, %v389
      %422 = vst.msk [vmem:[%s143 + $0x24] sm:$0xf] %vm255, %v390
      %423 = vst.msk [vmem:[%s143 + $0x28] sm:$0xf] %vm255, %v391
      %424 = vst.msk [vmem:[%s143 + $0x2c] sm:$0xf] %vm255, %v392
      %425 = vst.msk [vmem:[%s143 + $0x30] sm:$0xf] %vm255, %v393
      %426 = vst.msk [vmem:[%s143 + $0x34] sm:$0xf] %vm255, %v394
      %427 = vst.msk [vmem:[%s143 + $0x38] sm:$0xf] %vm255, %v395
      %428 = vst.msk [vmem:[%s143 + $0x3c] sm:$0xf] %vm255, %v396
      %429 = vst.msk [vmem:[%s143 + $0x40] sm:$0xf] %vm255, %v397
      %430 = vst.msk [vmem:[%s143 + $0x44] sm:$0xf] %vm255, %v398
      %431 = vst.msk [vmem:[%s143 + $0x48] sm:$0xf] %vm255, %v399
      %432 = vst.msk [vmem:[%s143 + $0x4c] sm:$0xf] %vm255, %v400
      %433 = vst.msk [vmem:[%s143 + $0x50] sm:$0xf] %vm255, %v401
      %434 = vst.msk [vmem:[%s143 + $0x54] sm:$0xf] %vm255, %v402
      %435 = vst.msk [vmem:[%s143 + $0x58] sm:$0xf] %vm255, %v403
      %436 = vst.msk [vmem:[%s143 + $0x5c] sm:$0xf] %vm255, %v404
      %437 = vst.msk [vmem:[%s143 + $0x60] sm:$0xf] %vm255, %v405
      %438 = vst.msk [vmem:[%s143 + $0x64] sm:$0xf] %vm255, %v406
      %439 = vst.msk [vmem:[%s143 + $0x68] sm:$0xf] %vm255, %v407
      %440 = vst.msk [vmem:[%s143 + $0x6c] sm:$0xf] %vm255, %v408
      %441 = vst.msk [vmem:[%s143 + $0x70] sm:$0xf] %vm255, %v409
      %442 = vst.msk [vmem:[%s143 + $0x74] sm:$0xf] %vm255, %v410
      %443 = vst.msk [vmem:[%s143 + $0x78] sm:$0xf] %vm255, %v411
      %444 = vst.msk [vmem:[%s143 + $0x7c] sm:$0xf] %vm255, %v412
      %p445 = scmp.lt.s32.totalorder %s13, 1
      %s446 = scalar_select %p445, %s13, 1
      %s447 = smul.addr %s446, 32
      %s448 = smul.addr %s447, 4
      %s449 = scalar_lea.vmem %s2, %s448
      // Predicated region
      $region29: #{cam_forward.2} parent=27 // pred_check
        %p450 = pneg %p78
      $region30: #{cam_forward.2} parent=27 // pred_check_branch
        %452 = sbr.rel (%p450) target = $region32
      $region31: #{cam_forward.2} parent=27 // pred_region
        _
      $region32: #{cam_forward.2} parent=27 // pred_fallthru
        _
    $region28: #{cam_forward.2} parent=5 // pred_fallthru
      _
    %p453 = scmp.le.s32.totalorder 2, %s8
    // Predicated region
    $region33: #{cam_forward.2} parent=5 // pred_check
      %p454 = pneg %p453
    $region34: #{cam_forward.2} parent=5 // pred_check_branch
      %456 = sbr.rel (%p454) target = $region36
    $region35: #{cam_forward.2} parent=5 // pred_region
      %s457 = ssub.s32 %s8, 2
      // Predicated region
      $region37: #{cam_forward.2} parent=35 // pred_check
        %p458 = pneg %p84
      $region38: #{cam_forward.2} parent=35 // pred_check_branch
        %460 = sbr.rel (%p458) target = $region40
      $region39: #{cam_forward.2} parent=35 // pred_region
        %p461 = scmp.lt.s32.totalorder %s14, 1
        %s462 = scalar_select %p461, %s14, 1
        %s463 = smul.addr %s462, 32
        %s464 = smul.addr %s463, 4
        %s465 = scalar_lea.vmem %s2, %s464
      $region40: #{cam_forward.2} parent=35 // pred_fallthru
        _
    $region36: #{cam_forward.2} parent=5 // pred_fallthru
      _
  $region6: #{cam_forward.2} parent=0 // loop_footer
    %s12 = sadd.s32 1, %s8
  $region7: #{cam_forward.2} parent=0 // loop_footer_branch
    %7 = sbr.rel target = $region3
  $region8: #{cam_forward.2} parent=0 // loop_exit
    _

</llo_original>
